<compile_context>
chip_gen: v5e
topology: v5e:2x2
jax: 0.10.0
libtpu: 0.0.40
codegen_flags: <defaults>
</compile_context>

<pallas_src>
import jax
import jax.numpy as jnp
from jax import lax
from jax.experimental import pallas as pl
from jax.experimental.pallas import tpu as pltpu


# ----------------------------- Pallas kernel --------------------------------
def _make_gcn_kernel(bt, L, D, S):
    HI = lax.Precision.HIGHEST

    def kernel(x_ref, adj_ref, w_ref, b_ref, o_ref, acc_ref):
        t = pl.program_id(1)                       # edge-type/direction slot

        @pl.when(t == 0)
        def _init():
            acc_ref[...] = jnp.zeros_like(acc_ref)

        x = x_ref[...]                             # (bt, L, D) f32, resident over t
        x2d = x.reshape(bt * L, D)

        # Fused per-slot projection: D proj cols + 1 gate col (+ zero pad),
        # bias folded in with a single broadcast add.  (bt*L, S)
        pg = jnp.dot(x2d, w_ref[...], precision=HI,
                     preferred_element_type=jnp.float32) + b_ref[...]
        pg3 = pg.reshape(bt, L, S)

        # This slot's adjacency (in-direction slots hold adj, out-direction
        # slots hold adj^T — prepared lane-cheaply in the wrapper).
        a = adj_ref[...].reshape(bt, L, L)         # (bt, L, L) f32 {0,1}

        # One batched contraction for the whole batch tile.
        h = jnp.einsum('bij,bjs->bis', a, pg3, precision=HI,
                       preferred_element_type=jnp.float32)      # (bt, L, S)

        gate = jax.nn.sigmoid(h[:, :, D:D + 1])    # (bt, L, 1) f32
        acc_ref[...] += h[:, :, :D] * gate         # gated message accumulate

        @pl.when(t == pl.num_programs(1) - 1)
        def _finalize():
            y = jnp.maximum(acc_ref[...] + x, 0.0)   # residual + ReLU
            o_ref[...] = y.reshape(bt, L * D)        # lane-dense store

    return kernel


# ------------------------------ helpers --------------------------------------
def _padded_bytes(shape, elt_bytes):
    """VMEM footprint of an f32/bf16 tile with (8,128) padding on the minor dims."""
    if len(shape) < 2:
        return pl.cdiv(int(shape[0]) if shape else 1, 128) * 128 * elt_bytes
    *lead, sub, lane = shape
    n = 1
    for d in lead:
        n *= int(d)
    return n * (pl.cdiv(int(sub), 8) * 8) * (pl.cdiv(int(lane), 128) * 128) * elt_bytes


def _pick_batch_tile(B, L):
    """Largest divisor of B keeping the flat (bt, L*D) out block TPU-legal
    (bt % 8 == 0 or bt == B), targeting ~256 MXU rows (v6e/v7x sweet spot) and
    preferring >= 2 grid steps so the batch axis can shard across v7x's 2 TCs."""
    target = max(1, 256 // max(L, 1))
    valid = [d for d in range(1, B + 1) if B % d == 0 and (d % 8 == 0 or d == B)]
    pref = [d for d in valid if d <= target and B // d >= 2]
    if pref:
        return max(pref)
    under = [d for d in valid if d <= target]
    return max(under) if under else min(valid)


# ------------------------------ layer wrapper --------------------------------
def gcn_layer(x, adj_cat, w_all, b_all):
    """One GCN block.  Grid = (batch tiles  x  2A edge slots)."""
    B, L, D = x.shape
    slots = adj_cat.shape[1]                 # 2 * num_all_edge_types
    S = w_all.shape[1] // slots              # lane-aligned per-slot stride
    bt = _pick_batch_tile(B, L)
    kernel = _make_gcn_kernel(bt, L, D, S)

    grid = (B // bt, slots)
    in_specs = [
        pl.BlockSpec((bt, L, D), lambda g, t: (g, 0, 0)),        # x (resident over t)
        pl.BlockSpec((bt, 1, L, L), lambda g, t: (g, t, 0, 0)),  # this slot's adjacency
        pl.BlockSpec((D, S), lambda g, t: (0, t)),               # this slot's weights
        pl.BlockSpec((1, S), lambda g, t: (0, t)),               # this slot's bias
    ]
    out_specs = pl.BlockSpec((bt, L * D), lambda g, t: (g, 0))   # lane-dense output

    # (8,128)-padded, double-buffered VMEM footprint vs. v5e's 16 MiB default.
    blk = 2 * (_padded_bytes((bt, L, D), 4) + _padded_bytes((bt, 1, L, L), 4)
               + _padded_bytes((D, S), 4) + _padded_bytes((1, S), 4)
               + _padded_bytes((bt, L * D), 4)) + _padded_bytes((bt, L, D), 4)
    vmem_limit = None if blk <= (16 << 20) else min(int(blk * 1.25) + (4 << 20), 100 << 20)

    cost = pl.CostEstimate(
        flops=2 * B * L * S * slots * (D + L),
        transcendentals=B * L * slots,
        bytes_accessed=(x.size + adj_cat.size + w_all.size + b_all.size + B * L * D) * 4,
    )

    out = pl.pallas_call(
        kernel,
        out_shape=jax.ShapeDtypeStruct((B, L * D), jnp.float32),
        grid_spec=pltpu.PrefetchScalarGridSpec(
            num_scalar_prefetch=0,
            grid=grid,
            in_specs=in_specs,
            out_specs=out_specs,
            scratch_shapes=[pltpu.VMEM((bt, L, D), jnp.float32)],  # f32 accumulator
        ),
        compiler_params=pltpu.CompilerParams(
            dimension_semantics=("parallel", "arbitrary"),
            vmem_limit_bytes=vmem_limit,
        ),
        cost_estimate=cost,
    )(x, adj_cat, w_all, b_all)
    return out.reshape(B, L, D)


# ------------------------- parameter init & packing --------------------------
def init_layer_params(key, in_dim, D, U):
    """torch nn.Linear-style init; weights stored as (in_dim, out_dim)."""
    ks = iter(jax.random.split(key, 16))
    bound = 1.0 / (in_dim ** 0.5)

    def lin(shape):
        return jax.random.uniform(next(ks), shape, jnp.float32, -bound, bound)

    return {
        # fused un-rare projections (torch Linear(in, D*U)): column c = u*D + d
        "w_in": lin((in_dim, U * D)),  "b_in": lin((U * D,)),
        "wg_in": lin((in_dim, U)),     "bg_in": lin((U,)),
        "w_out": lin((in_dim, U * D)), "b_out": lin((U * D,)),
        "wg_out": lin((in_dim, U)),    "bg_out": lin((U,)),
        # shared rare projections / gates
        "rw_in": lin((in_dim, D)),   "rb_in": lin((D,)),
        "rwg_in": lin((in_dim, 1)),  "rbg_in": lin((1,)),
        "rw_out": lin((in_dim, D)),  "rb_out": lin((D,)),
        "rwg_out": lin((in_dim, 1)), "rbg_out": lin((1,)),
    }


def pack_layer_params(p, U, A, D, S):
    """Pack per-slot [proj | gate | zero-pad] blocks of lane-aligned stride S.

    Slot order: [in-direction, edge type 0..A-1] then [out-direction, 0..A-1];
    edge types >= U reuse the shared rare parameters (duplicated per slot so
    the kernel needs no gather)."""
    Din = p["w_in"].shape[0]
    w_cols, b_cols = [], []
    wpad = jnp.zeros((Din, S - D - 1), jnp.float32)
    bpad = jnp.zeros((S - D - 1,), jnp.float32)

    def slot(w, b, wg, bg):
        w_cols.append(jnp.concatenate([w, wg, wpad], axis=1))
        b_cols.append(jnp.concatenate([b, bg, bpad]))

    for e in range(A):      # in-direction
        if e < U:
            slot(p["w_in"][:, e * D:(e + 1) * D], p["b_in"][e * D:(e + 1) * D],
                 p["wg_in"][:, e:e + 1], p["bg_in"][e:e + 1])
        else:
            slot(p["rw_in"], p["rb_in"], p["rwg_in"], p["rbg_in"])
    for e in range(A):      # out-direction
        if e < U:
            slot(p["w_out"][:, e * D:(e + 1) * D], p["b_out"][e * D:(e + 1) * D],
                 p["wg_out"][:, e:e + 1], p["bg_out"][e:e + 1])
        else:
            slot(p["rw_out"], p["rb_out"], p["rwg_out"], p["rbg_out"])

    w_all = jnp.concatenate(w_cols, axis=1)          # (Din, 2A*S) f32
    b_all = jnp.concatenate(b_cols)[None, :]         # (1,   2A*S) f32
    return w_all, b_all


# ------------------------- plain-JAX reference (sanity check) ----------------
def gcn_layer_ref(x, adj_f, p, U, A):
    HI = lax.Precision.HIGHEST
    B, L, D = x.shape
    acc = jnp.zeros_like(x)

    def prop(a, w, b, wg, bg):
        pr = jnp.einsum('bld,df->blf', x, w, precision=HI) + b
        gp = jnp.einsum('bld,df->blf', x, wg, precision=HI) + bg
        h = jnp.einsum('bij,bjf->bif', a, pr, precision=HI)
        g = jax.nn.sigmoid(jnp.einsum('bij,bjf->bif', a, gp, precision=HI))
        return h * g

    for e in range(A):
        a = adj_f[:, e]
        at = jnp.swapaxes(a, 1, 2)
        if e < U:
            acc = acc + prop(a, p["w_in"][:, e * D:(e + 1) * D],
                             p["b_in"][e * D:(e + 1) * D],
                             p["wg_in"][:, e:e + 1], p["bg_in"][e:e + 1])
            acc = acc + prop(at, p["w_out"][:, e * D:(e + 1) * D],
                             p["b_out"][e * D:(e + 1) * D],
                             p["wg_out"][:, e:e + 1], p["bg_out"][e:e + 1])
        else:
            acc = acc + prop(a, p["rw_in"], p["rb_in"], p["rwg_in"], p["rbg_in"])
            acc = acc + prop(at, p["rw_out"], p["rb_out"], p["rwg_out"], p["rbg_out"])
    return jnp.maximum(acc + x, 0.0)


if __name__ == "__main__":
    # small config consistent with the module (residual => in_features == gcn_dim)
    B, L, D = 2, 8, 32
    U, A = 4, 6                 # num_unRare_edge_types=4, num_all_edge_types=6
    num_blocks = 2
    S = pl.cdiv(D + 1, 128) * 128   # lane-aligned per-slot parameter stride

    key = jax.random.PRNGKey(0)
    kx, kadj, kp0, kp1 = jax.random.split(key, 4)
    seq_repr = jax.random.normal(kx, (B, L, D), jnp.float32)
    adj = jax.random.bernoulli(kadj, 0.3, (B, A, L, L)).astype(jnp.float32)
    # slots 0..A-1: in-arcs (adj), slots A..2A-1: out-arcs (adj^T)
    adj_cat = jnp.concatenate([adj, jnp.swapaxes(adj, -1, -2)], axis=1)

    layer_params = [init_layer_params(kp0, D, D, U),
                    init_layer_params(kp1, D, D, U)]
    packed = [pack_layer_params(p, U, A, D, S) for p in layer_params]

    # Pallas forward (one pallas_call per GCN block)
    h = seq_repr
    for (w_all, b_all) in packed:
        h = gcn_layer(h, adj_cat, w_all, b_all)
    h = jax.block_until_ready(h)

    # sanity check vs f32 HIGHEST-precision JAX reference
    href = seq_repr
    for p in layer_params:
        href = gcn_layer_ref(href, adj, p, U, A)
    assert h.shape == (B, L, D)
    max_err = float(jnp.max(jnp.abs(h - href)))
    assert jnp.allclose(h, href, atol=2e-2, rtol=2e-2), \
        f"mismatch vs reference (max abs err {max_err})"

    print("KERNEL_OK")
</pallas_src>

<mosaic_0001>
module attributes {stable_mosaic.version = 11 : i64} {
  func.func @kernel(%arg0: i32, %arg1: i32, %arg2: memref<2x8x32xf32, #tpu.memory_space<vmem>>, %arg3: memref<2x1x8x8xf32, #tpu.memory_space<vmem>>, %arg4: memref<32x128xf32, #tpu.memory_space<vmem>>, %arg5: memref<1x128xf32, #tpu.memory_space<vmem>>, %arg6: memref<2x256xf32, #tpu.memory_space<vmem>>, %arg7: memref<2x8x32xf32, #tpu.memory_space<vmem>>) attributes {dimension_semantics = [#tpu.dimension_semantics<parallel>, #tpu.dimension_semantics<arbitrary>], iteration_bounds = array<i64: 1, 12>, scalar_prefetch = 0 : i64, scratch_operands = 1 : i64, tpu.core_type = #tpu.core_type<tc>, window_params = [{transform_indices = @transform_0, window_bounds = array<i64: 2, 8, 32>}, {transform_indices = @transform_1, window_bounds = array<i64: 2, 1, 8, 8>}, {transform_indices = @transform_2, window_bounds = array<i64: 32, 128>}, {transform_indices = @transform_3, window_bounds = array<i64: 1, 128>}, {transform_indices = @transform_4, window_bounds = array<i64: 2, 256>}]} {
    %c0_i32 = arith.constant 0 : i32
    %0 = arith.cmpi eq, %arg1, %c0_i32 : i32
    %1 = arith.extui %0 : i1 to i32
    %c0_i32_0 = arith.constant 0 : i32
    %2 = arith.cmpi ne, %1, %c0_i32_0 : i32
    scf.if %2 {
      %cst_20 = arith.constant 0.000000e+00 : f32
      %29 = vector.broadcast %cst_20 : f32 to vector<2x8x32xf32>
      %c0_21 = arith.constant 0 : index
      %c0_22 = arith.constant 0 : index
      %c0_23 = arith.constant 0 : index
      %30 = vector.load %arg7[%c0_21, %c0_22, %c0_23] : memref<2x8x32xf32, #tpu.memory_space<vmem>>, vector<2x8x32xf32>
      tpu.vector_store %arg7[%c0_21, %c0_22, %c0_23], %29 {strides = array<i32>} : memref<2x8x32xf32, #tpu.memory_space<vmem>>, vector<2x8x32xf32>,
    } else {
    }
    %c0 = arith.constant 0 : index
    %c0_1 = arith.constant 0 : index
    %c0_2 = arith.constant 0 : index
    %3 = vector.load %arg2[%c0, %c0_1, %c0_2] : memref<2x8x32xf32, #tpu.memory_space<vmem>>, vector<2x8x32xf32>
    %4 = vector.shape_cast %3 : vector<2x8x32xf32> to vector<16x32xf32>
    %c0_3 = arith.constant 0 : index
    %c0_4 = arith.constant 0 : index
    %5 = vector.load %arg4[%c0_3, %c0_4] : memref<32x128xf32, #tpu.memory_space<vmem>>, vector<32x128xf32>
    %cst = arith.constant dense<0.000000e+00> : vector<16x128xf32>
    %6 = tpu.matmul %4, %5, %cst {dimension_numbers = #tpu.dot_dimension_numbers<[1], [0], [0], [1], [0, 0, 1, 1], [], []>, precision = #tpu.contract_precision<fp32>} : vector<16x32xf32>, vector<32x128xf32>, vector<16x128xf32> -> vector<16x128xf32>
    %c0_5 = arith.constant 0 : index
    %c0_6 = arith.constant 0 : index
    %7 = vector.load %arg5[%c0_5, %c0_6] : memref<1x128xf32, #tpu.memory_space<vmem>>, vector<1x128xf32>
    %8 = vector.broadcast %7 : vector<1x128xf32> to vector<16x128xf32>
    %9 = arith.addf %6, %8 : vector<16x128xf32>
    %10 = vector.shape_cast %9 : vector<16x128xf32> to vector<2x8x128xf32>
    %c0_7 = arith.constant 0 : index
    %c0_8 = arith.constant 0 : index
    %c0_9 = arith.constant 0 : index
    %c0_10 = arith.constant 0 : index
    %11 = vector.load %arg3[%c0_7, %c0_8, %c0_9, %c0_10] : memref<2x1x8x8xf32, #tpu.memory_space<vmem>>, vector<2x1x8x8xf32>
    %12 = vector.shape_cast %11 : vector<2x1x8x8xf32> to vector<2x8x8xf32>
    "tpu.trace_start"() <{level = 10 : i32, message = "bij,bjs->bis"}> : () -> ()
    %cst_11 = arith.constant dense<0.000000e+00> : vector<2x8x128xf32>
    %13 = tpu.matmul %12, %10, %cst_11 {dimension_numbers = #tpu.dot_dimension_numbers<[2], [1], [1], [2], [0, 0, 0, 1, 1, 2], [0], [0]>, precision = #tpu.contract_precision<fp32>} : vector<2x8x8xf32>, vector<2x8x128xf32>, vector<2x8x128xf32> -> vector<2x8x128xf32>
    "tpu.trace_stop"() : () -> ()
    %14 = vector.extract_strided_slice %13 {offsets = [0, 0, 32], sizes = [2, 8, 1], strides = [1, 1, 1]} : vector<2x8x128xf32> to vector<2x8x1xf32>
    %15 = arith.negf %14 : vector<2x8x1xf32>
    %16 = math.exp %15 : vector<2x8x1xf32>
    %cst_12 = arith.constant 1.000000e+00 : f32
    %17 = vector.broadcast %cst_12 : f32 to vector<2x8x1xf32>
    %18 = arith.addf %17, %16 : vector<2x8x1xf32>
    %19 = arith.divf %17, %18 : vector<2x8x1xf32>
    %c0_13 = arith.constant 0 : index
    %c0_14 = arith.constant 0 : index
    %c0_15 = arith.constant 0 : index
    %20 = vector.load %arg7[%c0_13, %c0_14, %c0_15] : memref<2x8x32xf32, #tpu.memory_space<vmem>>, vector<2x8x32xf32>
    %21 = vector.extract_strided_slice %13 {offsets = [0, 0, 0], sizes = [2, 8, 32], strides = [1, 1, 1]} : vector<2x8x128xf32> to vector<2x8x32xf32>
    %22 = vector.broadcast %19 : vector<2x8x1xf32> to vector<2x8x32xf32>
    %23 = arith.mulf %21, %22 : vector<2x8x32xf32>
    %24 = arith.addf %20, %23 : vector<2x8x32xf32>
    %c0_16 = arith.constant 0 : index
    %c0_17 = arith.constant 0 : index
    %c0_18 = arith.constant 0 : index
    %25 = vector.load %arg7[%c0_16, %c0_17, %c0_18] : memref<2x8x32xf32, #tpu.memory_space<vmem>>, vector<2x8x32xf32>
    tpu.vector_store %arg7[%c0_16, %c0_17, %c0_18], %24 {strides = array<i32>} : memref<2x8x32xf32, #tpu.memory_space<vmem>>, vector<2x8x32xf32>,
    %c11_i32 = arith.constant 11 : i32
    %26 = arith.cmpi eq, %arg1, %c11_i32 : i32
    %27 = arith.extui %26 : i1 to i32
    %c0_i32_19 = arith.constant 0 : i32
    %28 = arith.cmpi ne, %27, %c0_i32_19 : i32
    scf.if %28 {
      %c0_20 = arith.constant 0 : index
      %c0_21 = arith.constant 0 : index
      %c0_22 = arith.constant 0 : index
      %29 = vector.load %arg7[%c0_20, %c0_21, %c0_22] : memref<2x8x32xf32, #tpu.memory_space<vmem>>, vector<2x8x32xf32>
      %30 = arith.addf %29, %3 : vector<2x8x32xf32>
      %cst_23 = arith.constant 0.000000e+00 : f32
      %31 = vector.broadcast %cst_23 : f32 to vector<2x8x32xf32>
      %32 = arith.maximumf %30, %31 : vector<2x8x32xf32>
      %33 = vector.shape_cast %32 : vector<2x8x32xf32> to vector<2x256xf32>
      %c0_24 = arith.constant 0 : index
      %c0_25 = arith.constant 0 : index
      %34 = vector.load %arg6[%c0_24, %c0_25] : memref<2x256xf32, #tpu.memory_space<vmem>>, vector<2x256xf32>
      tpu.vector_store %arg6[%c0_24, %c0_25], %33 {strides = array<i32>} : memref<2x256xf32, #tpu.memory_space<vmem>>, vector<2x256xf32>,
    } else {
    }
    return
  }
  func.func @transform_0(%arg0: i32, %arg1: i32) -> (i32, i32, i32) {
    %c0_i32 = arith.constant 0 : i32
    %c0_i32_0 = arith.constant 0 : i32
    %c0_i32_1 = arith.constant 0 : i32
    return %arg0, %c0_i32, %c0_i32_0 : i32, i32, i32
  }
  func.func @transform_1(%arg0: i32, %arg1: i32) -> (i32, i32, i32, i32) {
    %c0_i32 = arith.constant 0 : i32
    %c0_i32_0 = arith.constant 0 : i32
    %c0_i32_1 = arith.constant 0 : i32
    return %arg0, %arg1, %c0_i32, %c0_i32_0 : i32, i32, i32, i32
  }
  func.func @transform_2(%arg0: i32, %arg1: i32) -> (i32, i32) {
    %c0_i32 = arith.constant 0 : i32
    %c0_i32_0 = arith.constant 0 : i32
    return %c0_i32, %arg1 : i32, i32
  }
  func.func @transform_3(%arg0: i32, %arg1: i32) -> (i32, i32) {
    %c0_i32 = arith.constant 0 : i32
    %c0_i32_0 = arith.constant 0 : i32
    return %c0_i32, %arg1 : i32, i32
  }
  func.func @transform_4(%arg0: i32, %arg1: i32) -> (i32, i32) {
    %c0_i32 = arith.constant 0 : i32
    %c0_i32_0 = arith.constant 0 : i32
    return %arg0, %c0_i32 : i32, i32
  }
}

</mosaic_0001>

<llo_original>
// kernel: tpu_custom_call.1
$region0: #{tpu_custom_call.1}
  #allocation0 [shape = 'u32[]', space=smem, size = 0x4, offset = 0x4, fixed_abs, tag = 'smem constant byte address 0x4 - core index']
  #allocation1 [shape = 'u32[72,128]{1,0:T(1,128)}', space=vmem, size = 0x9000, scoped, tag = 'internal scratch']
  #allocation2 [shape = 'f32[2,8,32]{2,1,0:T(8,128)}', space=vmem, size = 0x2000, scoped, tag = 'scratch operand']
  %s0 = inlined_call_operand.vmem [shape: f32[2,8,32], index: 0, kind: input, shape index: {}]
  %s1 = inlined_call_operand.vmem [shape: f32[2,12,8,8], index: 1, kind: input, shape index: {}]
  %s2 = inlined_call_operand.hbm [shape: f32[32,1536], index: 2, kind: input, shape index: {}]
  %s3 = inlined_call_operand.vmem [shape: f32[1,1536], index: 3, kind: input, shape index: {}]
  %s4 = inlined_call_operand.hbm [shape: f32[2,256], index: 4, kind: output, shape index: {}]
  %s5 = sld [smem:[#allocation0]]
  $region99: #{tpu_custom_call.1} parent=0
    _
  %s7 = ssub.s32 1, %s5
  %s8 = scalar_select 0, %s7, %s5
  $region1: #{tpu_custom_call.1} parent=0
    #allocation3 [shape = 'u8[16384]{0}', space=vmem, size = 0x4000, scoped, tag = 'input window, operand 1']
    #allocation4 [shape = 'u8[32768]{0}', space=vmem, size = 0x8000, scoped, tag = 'input window, operand 2']
    #allocation5 [shape = 's32[2]{0}', space=sflag, size = 0x8, scoped, tag = 'scoped memory for tpu_custom_call.1']
    #allocation6 [shape = 's32[2]{0}', space=sflag, size = 0x8, scoped, tag = 'scoped memory for tpu_custom_call.1']
    #allocation7 [shape = 'u8[2048]{0}', space=vmem, size = 0x800, scoped, tag = 'output window, operand 0, single buffered']
    %9 = vsyncpa [#allocation5], 0
    %s10 = scalar_lea.sflag [#allocation5], 1
    %11 = vsyncpa %s10, 0
    %12 = vsyncpa [#allocation6], 0
    loop: start=0, step=1, limit=14
    $region2: #{tpu_custom_call.1} parent=1 // loop_pre_header
      _
    $region3: #{tpu_custom_call.1} parent=1 // loop_header
      %s14 = sphi 0, %s18
      %p15 = scmp.ge.s32.totalorder %s14, 14
      %s21 = sphi 0, %s33
      %s22 = sphi 0, %s29
      %s23 = sphi 0, %s21
      %s24 = sphi 0, %s22
      %s25 = sphi 0, %s23
      %s26 = sphi 0, %s24
      %s36 = sphi 0, %s38
      %s39 = sphi 0, %s36
      %s40 = sphi 0, %s39
      %s56 = sphi 0, %s40
      %s64 = sphi 0, %s66
      %s67 = sphi 0, %s64
      %s68 = sphi 0, %s67
      %s84 = sphi 0, %s68
      %s90 = sphi 0, %s92
      %s93 = sphi 0, %s90
      %s94 = sphi 0, %s93
      %s110 = sphi 0, %s94
      %s116 = sphi 0, %s118
      %s119 = sphi 0, %s116
      %s120 = sphi 0, %s119
      %s136 = sphi 0, %s120
      %s142 = sphi 0, %s144
      %s145 = sphi 0, %s142
      %s146 = sphi 0, %s145
      %s162 = sphi 0, %s146
    $region4: #{tpu_custom_call.1} parent=1 // loop_header_branch
      %17 = sbr.rel (%p15) target = $region8
    $region5: #{tpu_custom_call.1} parent=1 // loop_body
      %s19 = ssub.s32 %s14, 1
      %s20 = ssub.s32 %s14, 2
      %s27 = sadd.s32 1, %s22
      %p28 = scmp.ge.s32.totalorder %s27, 12
      %s29 = scalar_select %p28, 0, %s27
      %s30 = sadd.s32 1, %s21
      %s31 = scalar_select %p28, %s30, %s21
      %p32 = scmp.ge.s32.totalorder %s31, 1
      %s33 = scalar_select %p32, 0, %s31
      %s34 = ssub.s32 %s21, %s33
      %p35 = scmp.eq.s32.totalorder %s34, 0
      %s37 = sadd.s32 %s36, 1
      %s38 = scalar_select %p35, %s36, %s37
      %p41 = pneg %p35
      %p42 = scmp.eq.s32.totalorder %s14, 11
      %p43 = por %p41, %p42
      %p44 = scmp.ne.s32.totalorder %s36, %s39
      %p45 = scmp.eq.s32.totalorder %s14, 0
      %p46 = por %p44, %p45
      %p47 = scmp.ne.s32.totalorder %s36, %s39
      %p48 = scmp.eq.s32.totalorder %s19, 11
      %p49 = por %p47, %p48
      %p50 = scmp.ne.s32.totalorder %s39, %s40
      %p51 = scmp.eq.s32.totalorder %s19, 0
      %p52 = por %p50, %p51
      %p53 = scmp.ne.s32.totalorder %s39, %s40
      %p54 = scmp.eq.s32.totalorder %s20, 11
      %p55 = por %p53, %p54
      %p57 = scmp.ne.s32.totalorder %s40, %s56
      %p58 = scmp.eq.s32.totalorder %s20, 0
      %p59 = por %p57, %p58
      %s60 = ssub.s32 %s21, %s33
      %s61 = ssub.s32 %s22, %s29
      %s62 = sor.u32 %s60, %s61
      %p63 = scmp.eq.s32.totalorder %s62, 0
      %s65 = sadd.s32 %s64, 1
      %s66 = scalar_select %p63, %s64, %s65
      %p69 = pneg %p63
      %p70 = scmp.eq.s32.totalorder %s14, 11
      %p71 = por %p69, %p70
      %p72 = scmp.ne.s32.totalorder %s64, %s67
      %p73 = scmp.eq.s32.totalorder %s14, 0
      %p74 = por %p72, %p73
      %p75 = scmp.ne.s32.totalorder %s64, %s67
      %p76 = scmp.eq.s32.totalorder %s19, 11
      %p77 = por %p75, %p76
      %p78 = scmp.ne.s32.totalorder %s67, %s68
      %p79 = scmp.eq.s32.totalorder %s19, 0
      %p80 = por %p78, %p79
      %p81 = scmp.ne.s32.totalorder %s67, %s68
      %p82 = scmp.eq.s32.totalorder %s20, 11
      %p83 = por %p81, %p82
      %p85 = scmp.ne.s32.totalorder %s68, %s84
      %p86 = scmp.eq.s32.totalorder %s20, 0
      %p87 = por %p85, %p86
      %s88 = ssub.s32 %s22, %s29
      %p89 = scmp.eq.s32.totalorder %s88, 0
      %s91 = sadd.s32 %s90, 1
      %s92 = scalar_select %p89, %s90, %s91
      %p95 = pneg %p89
      %p96 = scmp.eq.s32.totalorder %s14, 11
      %p97 = por %p95, %p96
      %p98 = scmp.ne.s32.totalorder %s90, %s93
      %p99 = scmp.eq.s32.totalorder %s14, 0
      %p100 = por %p98, %p99
      %p101 = scmp.ne.s32.totalorder %s90, %s93
      %p102 = scmp.eq.s32.totalorder %s19, 11
      %p103 = por %p101, %p102
      %p104 = scmp.ne.s32.totalorder %s93, %s94
      %p105 = scmp.eq.s32.totalorder %s19, 0
      %p106 = por %p104, %p105
      %p107 = scmp.ne.s32.totalorder %s93, %s94
      %p108 = scmp.eq.s32.totalorder %s20, 11
      %p109 = por %p107, %p108
      %p111 = scmp.ne.s32.totalorder %s94, %s110
      %p112 = scmp.eq.s32.totalorder %s20, 0
      %p113 = por %p111, %p112
      %s114 = ssub.s32 %s22, %s29
      %p115 = scmp.eq.s32.totalorder %s114, 0
      %s117 = sadd.s32 %s116, 1
      %s118 = scalar_select %p115, %s116, %s117
      %p121 = pneg %p115
      %p122 = scmp.eq.s32.totalorder %s14, 11
      %p123 = por %p121, %p122
      %p124 = scmp.ne.s32.totalorder %s116, %s119
      %p125 = scmp.eq.s32.totalorder %s14, 0
      %p126 = por %p124, %p125
      %p127 = scmp.ne.s32.totalorder %s116, %s119
      %p128 = scmp.eq.s32.totalorder %s19, 11
      %p129 = por %p127, %p128
      %p130 = scmp.ne.s32.totalorder %s119, %s120
      %p131 = scmp.eq.s32.totalorder %s19, 0
      %p132 = por %p130, %p131
      %p133 = scmp.ne.s32.totalorder %s119, %s120
      %p134 = scmp.eq.s32.totalorder %s20, 11
      %p135 = por %p133, %p134
      %p137 = scmp.ne.s32.totalorder %s120, %s136
      %p138 = scmp.eq.s32.totalorder %s20, 0
      %p139 = por %p137, %p138
      %s140 = ssub.s32 %s21, %s33
      %p141 = scmp.eq.s32.totalorder %s140, 0
      %s143 = sadd.s32 %s142, 1
      %s144 = scalar_select %p141, %s142, %s143
      %p147 = pneg %p141
      %p148 = scmp.eq.s32.totalorder %s14, 11
      %p149 = por %p147, %p148
      %p150 = scmp.ne.s32.totalorder %s142, %s145
      %p151 = scmp.eq.s32.totalorder %s14, 0
      %p152 = por %p150, %p151
      %p153 = scmp.ne.s32.totalorder %s142, %s145
      %p154 = scmp.eq.s32.totalorder %s19, 11
      %p155 = por %p153, %p154
      %p156 = scmp.ne.s32.totalorder %s145, %s146
      %p157 = scmp.eq.s32.totalorder %s19, 0
      %p158 = por %p156, %p157
      %p159 = scmp.ne.s32.totalorder %s145, %s146
      %p160 = scmp.eq.s32.totalorder %s20, 11
      %p161 = por %p159, %p160
      %p163 = scmp.ne.s32.totalorder %s146, %s162
      %p164 = scmp.eq.s32.totalorder %s20, 0
      %p165 = por %p163, %p164
      %p166 = scmp.le.s32.totalorder 1, %s14
      %p167 = scmp.lt.s32.totalorder %s14, 13
      %p168 = pnand %p166, %p167
      %p169 = pneg %p168
      // Predicated region
      $region9: #{tpu_custom_call.1} parent=5 // pred_check
        _
      $region10: #{tpu_custom_call.1} parent=5 // pred_check_branch
        %171 = sbr.rel (%p168) target = $region12
      $region11: #{tpu_custom_call.1} parent=5 // pred_region
        %s172 = ssub.s32 %s14, 1
        // Predicated region
        $region13: #{tpu_custom_call.1} parent=11 // pred_check
          %p173 = pneg %p52
        $region14: #{tpu_custom_call.1} parent=11 // pred_check_branch
          %175 = sbr.rel (%p173) target = $region16
        $region15: #{tpu_custom_call.1} parent=11 // pred_region
          %s176 = smul.u32 2, %s23
          %p177 = scmp.lt.s32.totalorder %s176, 1
          %s178 = scalar_select %p177, %s176, 1
          %s179 = smul.addr %s178, 8
          %s180 = scalar_lea.vmem %s0, %s179
          %s181 = smul.u32 2, %s23
        $region16: #{tpu_custom_call.1} parent=11 // pred_fallthru
          _
      $region12: #{tpu_custom_call.1} parent=5 // pred_fallthru
        _
      %p182 = scmp.lt.s32.totalorder %s14, 12
      // Predicated region
      $region17: #{tpu_custom_call.1} parent=5 // pred_check
        %p183 = pneg %p182
      $region18: #{tpu_custom_call.1} parent=5 // pred_check_branch
        %185 = sbr.rel (%p183) target = $region20
      $region19: #{tpu_custom_call.1} parent=5 // pred_region
        // Predicated region
        $region21: #{tpu_custom_call.1} parent=19 // pred_check
          %p186 = pneg %p74
        $region22: #{tpu_custom_call.1} parent=19 // pred_check_branch
          %188 = sbr.rel (%p186) target = $region24
        $region23: #{tpu_custom_call.1} parent=19 // pred_region
          %s189 = sand.u32 %s64, 1
          %s190 = sand.u32 %s64, 1
          %s191 = smul.addr %s190, 16
          %s192 = scalar_lea.vmem [#allocation3], %s191
          %s193 = smul.u32 2, %s21
          %s194 = smul.addr %s193, 12
          %s195 = sadd.s32 %s22, %s194
          %s196 = smul.addr %s195, 8
          %s197 = scalar_lea.vmem %s1, %s196
          // Predicated region
          $region25: #{tpu_custom_call.1} parent=23 // pred_check
            _
          $region26: #{tpu_custom_call.1} parent=23 // pred_check_branch
            %199 = sbr.rel (0) target = $region28
          $region27: #{tpu_custom_call.1} parent=23 // pred_region
            // Predicated region
            $region29: #{tpu_custom_call.1} parent=27 // pred_check
              _
            $region30: #{tpu_custom_call.1} parent=27 // pred_check_branch
              %201 = sbr.rel (0) target = $region32
            $region31: #{tpu_custom_call.1} parent=27 // pred_region
              // Predicated region
              $region44: #{tpu_custom_call.1} parent=31 // pred_check
                _
              $region45: #{tpu_custom_call.1} parent=31 // pred_check_branch
                %219 = sbr.rel (0) target = $region47
              $region46: #{tpu_custom_call.1} parent=31 // pred_region
                loop: start=0, step=1, limit=1
                $region48: #{tpu_custom_call.1} parent=46 // loop_pre_header
                  _
                $region49: #{tpu_custom_call.1} parent=46 // loop_header
                  %s221 = sphi 0, %s225
                  %p222 = scmp.ge.s32.totalorder %s221, 1
                  %s226 = sphi %s197, %s197
                  %s227 = sphi %s192, %s192
                $region50: #{tpu_custom_call.1} parent=46 // loop_header_branch
                  %224 = sbr.rel (%p222) target = $region54
                $region51: #{tpu_custom_call.1} parent=46 // loop_body
                  %v228 = vld [vmem:[%s226] sm:$0xff]
                  %229 = vst [vmem:[%s227] sm:$0xff] %v228
                  %v230 = vld [vmem:[%s226 + $0x60] sm:$0xff]
                  %231 = vst [vmem:[%s227 + $0x8] sm:$0xff] %v230
                $region52: #{tpu_custom_call.1} parent=46 // loop_footer
                  %s225 = sadd.s32 1, %s221
                $region53: #{tpu_custom_call.1} parent=46 // loop_footer_branch
                  %220 = sbr.rel target = $region49
                $region54: #{tpu_custom_call.1} parent=46 // loop_exit
                  _
              $region47: #{tpu_custom_call.1} parent=31 // pred_fallthru
                _
              // Predicated region
              $region55: #{tpu_custom_call.1} parent=31 // pred_check
                _
              $region56: #{tpu_custom_call.1} parent=31 // pred_check_branch
                %233 = sbr.rel target = $region58
              $region57: #{tpu_custom_call.1} parent=31 // pred_region
                _
              $region58: #{tpu_custom_call.1} parent=31 // pred_fallthru
                _
            $region32: #{tpu_custom_call.1} parent=27 // pred_fallthru
              _
            // Predicated region
            $region33: #{tpu_custom_call.1} parent=27 // pred_check
              _
            $region34: #{tpu_custom_call.1} parent=27 // pred_check_branch
              %203 = sbr.rel target = $region36
            $region35: #{tpu_custom_call.1} parent=27 // pred_region
              %s205 = ssub.s32 256, 1
              loop: start=0, step=1, limit=1
              $region37: #{tpu_custom_call.1} parent=35 // loop_pre_header
                _
              $region38: #{tpu_custom_call.1} parent=35 // loop_header
                %s207 = sphi 0, %s211
                %p208 = scmp.ge.s32.totalorder %s207, 1
                %s212 = sphi %s197, %s197
                %s213 = sphi %s192, %s192
              $region39: #{tpu_custom_call.1} parent=35 // loop_header_branch
                %210 = sbr.rel (%p208) target = $region43
              $region40: #{tpu_custom_call.1} parent=35 // loop_body
                %v214 = vld [vmem:[%s212] sm:%s205]
                %215 = vst [vmem:[%s213] sm:%s205] %v214
                %v216 = vld [vmem:[%s212 + $0x60] sm:%s205]
                %217 = vst [vmem:[%s213 + $0x8] sm:%s205] %v216
              $region41: #{tpu_custom_call.1} parent=35 // loop_footer
                %s211 = sadd.s32 1, %s207
              $region42: #{tpu_custom_call.1} parent=35 // loop_footer_branch
                %206 = sbr.rel target = $region38
              $region43: #{tpu_custom_call.1} parent=35 // loop_exit
                _
            $region36: #{tpu_custom_call.1} parent=27 // pred_fallthru
              _
          $region28: #{tpu_custom_call.1} parent=23 // pred_fallthru
            _
          %234 = vnop
        $region24: #{tpu_custom_call.1} parent=19 // pred_fallthru
          _
        // Predicated region
        $region59: #{tpu_custom_call.1} parent=19 // pred_check
          %p235 = pneg %p100
        $region60: #{tpu_custom_call.1} parent=19 // pred_check_branch
          %237 = sbr.rel (%p235) target = $region62
        $region61: #{tpu_custom_call.1} parent=19 // pred_region
          %s238 = sand.u32 %s90, 1
          %s239 = scalar_lea.sflag [#allocation5], %s238
          %s240 = sand.u32 %s90, 1
          %s241 = smul.addr %s240, 32
          %s242 = scalar_lea.vmem [#allocation4], %s241
          %244 = vsyncadd %s239, 0
          %s245 = smul.addr %s22, 8
          %s246 = scalar_lea.hbm %s2, %s245
          %s247 = sshll.u32 %s246, 4
          %s248 = int_to_ptr.hbm [resolvable:$true] %s247
          %s249 = sshll.u32 %s242, 4
          %s250 = int_to_ptr.vmem [resolvable:$true] %s249
          %255 = dma.hbm_to_vmem [thread:$0]  %s248, 512, %s250, %s239, 1536, 128, 8
        $region62: #{tpu_custom_call.1} parent=19 // pred_fallthru
          _
        // Predicated region
        $region63: #{tpu_custom_call.1} parent=19 // pred_check
          %p256 = pneg %p126
        $region64: #{tpu_custom_call.1} parent=19 // pred_check_branch
          %258 = sbr.rel (%p256) target = $region66
        $region65: #{tpu_custom_call.1} parent=19 // pred_region
          %p259 = scmp.lt.s32.totalorder %s22, 11
          %s260 = scalar_select %p259, %s22, 11
          %s261 = scalar_lea.vmem %s3, %s260
        $region66: #{tpu_custom_call.1} parent=19 // pred_fallthru
          _
      $region20: #{tpu_custom_call.1} parent=5 // pred_fallthru
        _
      %p262 = scmp.le.s32.totalorder 1, %s14
      %p263 = scmp.lt.s32.totalorder %s14, 13
      %p264 = pnand %p262, %p263
      %p265 = pneg %p264
      // Predicated region
      $region67: #{tpu_custom_call.1} parent=5 // pred_check
        _
      $region68: #{tpu_custom_call.1} parent=5 // pred_check_branch
        %267 = sbr.rel (%p264) target = $region70
      $region69: #{tpu_custom_call.1} parent=5 // pred_region
        %s268 = ssub.s32 %s14, 1
        %s269 = sand.u32 %s67, 1
        %s270 = sand.u32 %s67, 1
        %s271 = smul.addr %s270, 16
        %s272 = scalar_lea.vmem [#allocation3], %s271
        // Predicated region
        $region71: #{tpu_custom_call.1} parent=69 // pred_check
          %p273 = pneg %p80
        $region72: #{tpu_custom_call.1} parent=69 // pred_check_branch
          %275 = sbr.rel (%p273) target = $region74
        $region73: #{tpu_custom_call.1} parent=69 // pred_region
          _
        $region74: #{tpu_custom_call.1} parent=69 // pred_fallthru
          _
        %s276 = sand.u32 %s93, 1
        %s277 = scalar_lea.sflag [#allocation5], %s276
        %s278 = sand.u32 %s93, 1
        %s279 = smul.addr %s278, 32
        %s280 = scalar_lea.vmem [#allocation4], %s279
        // Predicated region
        $region75: #{tpu_custom_call.1} parent=69 // pred_check
          %p281 = pneg %p106
        $region76: #{tpu_custom_call.1} parent=69 // pred_check_branch
          %283 = sbr.rel (%p281) target = $region78
        $region77: #{tpu_custom_call.1} parent=69 // pred_region
          %285 = dma.done %s277, 512
        $region78: #{tpu_custom_call.1} parent=69 // pred_fallthru
          _
        %s286 = smul.u32 2, %s23
        %p287 = scmp.lt.s32.totalorder %s286, 1
        %s288 = scalar_select %p287, %s286, 1
        %s289 = smul.addr %s288, 8
        %s290 = scalar_lea.vmem %s0, %s289
        %p291 = pneg %p52
        %p292 = pneg %p49
        %s293 = sand.u32 %s67, 1
        %s294 = sand.u32 %s67, 1
        %s295 = smul.addr %s294, 16
        %s296 = scalar_lea.vmem [#allocation3], %s295
        %p297 = pneg %p80
        %p298 = pneg %p77
        %s299 = sand.u32 %s93, 1
        %s300 = scalar_lea.sflag [#allocation5], %s299
        %s301 = sand.u32 %s93, 1
        %s302 = smul.addr %s301, 32
        %s303 = scalar_lea.vmem [#allocation4], %s302
        %p304 = pneg %p106
        %p305 = pneg %p103
        %p306 = scmp.lt.s32.totalorder %s24, 11
        %s307 = scalar_select %p306, %s24, 11
        %s308 = scalar_lea.vmem %s3, %s307
        %p309 = pneg %p132
        %p310 = pneg %p129
        %p311 = pneg %p158
        %p312 = pneg %p155
        %s313 = smul.u32 2, %s23
        %p314 = scmp.lt.s32.totalorder %s313, 1
        %s315 = scalar_select %p314, %s313, 1
        %s316 = smul.addr %s315, 8
        %s317 = scalar_lea.vmem %s0, %s316
        %s318 = smul.u32 2, %s23
        %s319 = smul.u32 2, %s23
        %p320 = scmp.lt.s32.totalorder %s24, 11
        %s321 = scalar_select %p320, %s24, 11
        %s322 = scalar_lea.vmem %s3, %s321
        %p323 = scmp.eq.s32.totalorder %s24, 0
        // Predicated region
        $region79: #{tpu_custom_call.1} parent=69 // pred_check
          %p324 = pneg %p323
        $region80: #{tpu_custom_call.1} parent=69 // pred_check_branch
          %326 = sbr.rel (%p324) target = $region82
        $region81: #{tpu_custom_call.1} parent=69 // pred_region
          %vm327 = vcmask 261120
          %328 = vst.msk [vmem:[#allocation2] sm:$0xff] %vm327, 0.0
          %329 = vst.msk [vmem:[#allocation2 + $0x8] sm:$0xff] %vm327, 0.0
        $region82: #{tpu_custom_call.1} parent=69 // pred_fallthru
          _
        %v330 = vld [vmem:[%s317] sm:$0xff]
        %v331 = vld [vmem:[%s317 + $0x8] sm:$0xff]
        %v332 = vld [vmem:[%s280] sm:$0xff]
        %v333 = vld [vmem:[%s280 + $0x8] sm:$0xff]
        %v334 = vld [vmem:[%s280 + $0x10] sm:$0xff]
        %v335 = vld [vmem:[%s280 + $0x18] sm:$0xff]
        %v336 = vld [vmem:[%s322] sm:$0x1]
        %v338 = vperm.slane %v336, 0
        %vm340 = vcmask 261120
        %v342 = vsel %vm340, %v330, 0
        %v345 = vsel %vm340, %v331, 0
        %347 = vmatpush.msra.mxu0 0.0
        %348 = vmatpush.msra.mxu0 0.0
        %349 = vmatpush.msra.mxu0 0.0
        %350 = vmatpush.msra.mxu0 0.0
        %351 = vmatpush.msra.mxu0 0.0
        %352 = vmatpush.msra.mxu0 0.0
        %353 = vmatpush.msra.mxu0 0.0
        %354 = vmatpush.msra.mxu0 0.0
        %355 = vmatpush.msra.mxu0 0.0
        %356 = vmatpush.msra.mxu0 0.0
        %357 = vmatpush.msra.mxu0 0.0
        %358 = vmatpush.msra.mxu0 0.0
        %v359 = vand.u32 %v335, 4294901760
        %360 = vmatpush.msra.mxu0 %v359
        %v361 = vand.u32 %v334, 4294901760
        %362 = vmatpush.msra.mxu0 %v361
        %v363 = vand.u32 %v333, 4294901760
        %364 = vmatpush.msra.mxu0 %v363
        %v365 = vand.u32 %v332, 4294901760
        %366 = vmatpush.msra.mxu0 %v365
        %v367 = vand.u32 %v342, 4294901760
        %v368 = vsub.f32 %v342, %v367
        %v369 = vand.u32 %v368, 4294901760
        %v370 = vsub.f32 %v368, %v369
        %v371 = vand.u32 %v370, 4294901760
        %372 = vmatmul.f32.gmra.mxu0 %v371
        %v373 = vpop.f32.mrf.mxu0
        %v374 = vadd.f32 %v338, %v373
        %v375 = vand.u32 %v345, 4294901760
        %v376 = vsub.f32 %v345, %v375
        %v377 = vand.u32 %v376, 4294901760
        %v378 = vsub.f32 %v376, %v377
        %v379 = vand.u32 %v378, 4294901760
        %380 = vmatmul.f32.gmra.mxu0 %v379
        %v381 = vpop.f32.mrf.mxu0
        %v382 = vadd.f32 %v338, %v381
        %383 = vdwg.mxu0
        %384 = vmatpush.msra.mxu0 0.0
        %385 = vmatpush.msra.mxu0 0.0
        %386 = vmatpush.msra.mxu0 0.0
        %387 = vmatpush.msra.mxu0 0.0
        %388 = vmatpush.msra.mxu0 0.0
        %389 = vmatpush.msra.mxu0 0.0
        %390 = vmatpush.msra.mxu0 0.0
        %391 = vmatpush.msra.mxu0 0.0
        %392 = vmatpush.msra.mxu0 0.0
        %393 = vmatpush.msra.mxu0 0.0
        %394 = vmatpush.msra.mxu0 0.0
        %395 = vmatpush.msra.mxu0 0.0
        %v396 = vand.u32 %v335, 4294901760
        %v397 = vsub.f32 %v335, %v396
        %v398 = vand.u32 %v397, 4294901760
        %v399 = vsub.f32 %v397, %v398
        %v400 = vand.u32 %v399, 4294901760
        %401 = vmatpush.msra.mxu0 %v400
        %v402 = vand.u32 %v334, 4294901760
        %v403 = vsub.f32 %v334, %v402
        %v404 = vand.u32 %v403, 4294901760
        %v405 = vsub.f32 %v403, %v404
        %v406 = vand.u32 %v405, 4294901760
        %407 = vmatpush.msra.mxu0 %v406
        %v408 = vand.u32 %v333, 4294901760
        %v409 = vsub.f32 %v333, %v408
        %v410 = vand.u32 %v409, 4294901760
        %v411 = vsub.f32 %v409, %v410
        %v412 = vand.u32 %v411, 4294901760
        %413 = vmatpush.msra.mxu0 %v412
        %v414 = vand.u32 %v332, 4294901760
        %v415 = vsub.f32 %v332, %v414
        %v416 = vand.u32 %v415, 4294901760
        %v417 = vsub.f32 %v415, %v416
        %v418 = vand.u32 %v417, 4294901760
        %419 = vmatpush.msra.mxu0 %v418
        %v420 = vand.u32 %v342, 4294901760
        %421 = vmatmul.f32.gmra.mxu0 %v420
        %v422 = vpop.f32.mrf.mxu0
        %v423 = vadd.f32 %v374, %v422
        %v424 = vand.u32 %v345, 4294901760
        %425 = vmatmul.f32.gmra.mxu0 %v424
        %v426 = vpop.f32.mrf.mxu0
        %v427 = vadd.f32 %v382, %v426
        %428 = vdwg.mxu0
        %429 = vmatpush.msra.mxu0 0.0
        %430 = vmatpush.msra.mxu0 0.0
        %431 = vmatpush.msra.mxu0 0.0
        %432 = vmatpush.msra.mxu0 0.0
        %433 = vmatpush.msra.mxu0 0.0
        %434 = vmatpush.msra.mxu0 0.0
        %435 = vmatpush.msra.mxu0 0.0
        %436 = vmatpush.msra.mxu0 0.0
        %437 = vmatpush.msra.mxu0 0.0
        %438 = vmatpush.msra.mxu0 0.0
        %439 = vmatpush.msra.mxu0 0.0
        %440 = vmatpush.msra.mxu0 0.0
        %v441 = vand.u32 %v335, 4294901760
        %v442 = vsub.f32 %v335, %v441
        %443 = vmatpush.msra.mxu0 %v442
        %v444 = vand.u32 %v334, 4294901760
        %v445 = vsub.f32 %v334, %v444
        %446 = vmatpush.msra.mxu0 %v445
        %v447 = vand.u32 %v333, 4294901760
        %v448 = vsub.f32 %v333, %v447
        %449 = vmatpush.msra.mxu0 %v448
        %v450 = vand.u32 %v332, 4294901760
        %v451 = vsub.f32 %v332, %v450
        %452 = vmatpush.msra.mxu0 %v451
        %v453 = vand.u32 %v342, 4294901760
        %v454 = vsub.f32 %v342, %v453
        %455 = vmatmul.f32.gmra.mxu0 %v454
        %v456 = vpop.f32.mrf.mxu0
        %v457 = vadd.f32 %v423, %v456
        %v458 = vand.u32 %v345, 4294901760
        %v459 = vsub.f32 %v345, %v458
        %460 = vmatmul.f32.gmra.mxu0 %v459
        %v461 = vpop.f32.mrf.mxu0
        %v462 = vadd.f32 %v427, %v461
        %463 = vdwg.mxu0
        %464 = vmatpush.msra.mxu0 0.0
        %465 = vmatpush.msra.mxu0 0.0
        %466 = vmatpush.msra.mxu0 0.0
        %467 = vmatpush.msra.mxu0 0.0
        %468 = vmatpush.msra.mxu0 0.0
        %469 = vmatpush.msra.mxu0 0.0
        %470 = vmatpush.msra.mxu0 0.0
        %471 = vmatpush.msra.mxu0 0.0
        %472 = vmatpush.msra.mxu0 0.0
        %473 = vmatpush.msra.mxu0 0.0
        %474 = vmatpush.msra.mxu0 0.0
        %475 = vmatpush.msra.mxu0 0.0
        %v476 = vand.u32 %v335, 4294901760
        %477 = vmatpush.msra.mxu0 %v476
        %v478 = vand.u32 %v334, 4294901760
        %479 = vmatpush.msra.mxu0 %v478
        %v480 = vand.u32 %v333, 4294901760
        %481 = vmatpush.msra.mxu0 %v480
        %v482 = vand.u32 %v332, 4294901760
        %483 = vmatpush.msra.mxu0 %v482
        %v484 = vand.u32 %v342, 4294901760
        %v485 = vsub.f32 %v342, %v484
        %v486 = vand.u32 %v485, 4294901760
        %487 = vmatmul.f32.gmra.mxu0 %v486
        %v488 = vpop.f32.mrf.mxu0
        %v489 = vadd.f32 %v457, %v488
        %v490 = vand.u32 %v345, 4294901760
        %v491 = vsub.f32 %v345, %v490
        %v492 = vand.u32 %v491, 4294901760
        %493 = vmatmul.f32.gmra.mxu0 %v492
        %v494 = vpop.f32.mrf.mxu0
        %v495 = vadd.f32 %v462, %v494
        %496 = vdwg.mxu0
        %497 = vmatpush.msra.mxu0 0.0
        %498 = vmatpush.msra.mxu0 0.0
        %499 = vmatpush.msra.mxu0 0.0
        %500 = vmatpush.msra.mxu0 0.0
        %501 = vmatpush.msra.mxu0 0.0
        %502 = vmatpush.msra.mxu0 0.0
        %503 = vmatpush.msra.mxu0 0.0
        %504 = vmatpush.msra.mxu0 0.0
        %505 = vmatpush.msra.mxu0 0.0
        %506 = vmatpush.msra.mxu0 0.0
        %507 = vmatpush.msra.mxu0 0.0
        %508 = vmatpush.msra.mxu0 0.0
        %v509 = vand.u32 %v335, 4294901760
        %v510 = vsub.f32 %v335, %v509
        %v511 = vand.u32 %v510, 4294901760
        %512 = vmatpush.msra.mxu0 %v511
        %v513 = vand.u32 %v334, 4294901760
        %v514 = vsub.f32 %v334, %v513
        %v515 = vand.u32 %v514, 4294901760
        %516 = vmatpush.msra.mxu0 %v515
        %v517 = vand.u32 %v333, 4294901760
        %v518 = vsub.f32 %v333, %v517
        %v519 = vand.u32 %v518, 4294901760
        %520 = vmatpush.msra.mxu0 %v519
        %v521 = vand.u32 %v332, 4294901760
        %v522 = vsub.f32 %v332, %v521
        %v523 = vand.u32 %v522, 4294901760
        %524 = vmatpush.msra.mxu0 %v523
        %v525 = vand.u32 %v342, 4294901760
        %526 = vmatmul.f32.gmra.mxu0 %v525
        %v527 = vpop.f32.mrf.mxu0
        %v528 = vadd.f32 %v489, %v527
        %v529 = vand.u32 %v345, 4294901760
        %530 = vmatmul.f32.gmra.mxu0 %v529
        %v531 = vpop.f32.mrf.mxu0
        %v532 = vadd.f32 %v495, %v531
        %533 = vdwg.mxu0
        %534 = vmatpush.msra.mxu0 0.0
        %535 = vmatpush.msra.mxu0 0.0
        %536 = vmatpush.msra.mxu0 0.0
        %537 = vmatpush.msra.mxu0 0.0
        %538 = vmatpush.msra.mxu0 0.0
        %539 = vmatpush.msra.mxu0 0.0
        %540 = vmatpush.msra.mxu0 0.0
        %541 = vmatpush.msra.mxu0 0.0
        %542 = vmatpush.msra.mxu0 0.0
        %543 = vmatpush.msra.mxu0 0.0
        %544 = vmatpush.msra.mxu0 0.0
        %545 = vmatpush.msra.mxu0 0.0
        %v546 = vand.u32 %v335, 4294901760
        %547 = vmatpush.msra.mxu0 %v546
        %v548 = vand.u32 %v334, 4294901760
        %549 = vmatpush.msra.mxu0 %v548
        %v550 = vand.u32 %v333, 4294901760
        %551 = vmatpush.msra.mxu0 %v550
        %v552 = vand.u32 %v332, 4294901760
        %553 = vmatpush.msra.mxu0 %v552
        %v554 = vand.u32 %v342, 4294901760
        %555 = vmatmul.f32.gmra.mxu0 %v554
        %v556 = vpop.f32.mrf.mxu0
        %v557 = vadd.f32 %v528, %v556
        %v558 = vand.u32 %v345, 4294901760
        %559 = vmatmul.f32.gmra.mxu0 %v558
        %v560 = vpop.f32.mrf.mxu0
        %v561 = vadd.f32 %v532, %v560
        %562 = vdwg.mxu0
        %v563 = vld [vmem:[%s272] sm:$0xff]
        %v564 = vld [vmem:[%s272 + $0x8] sm:$0xff]
        %vm565 = vcmask 64512
        %v567 = vsel %vm565, %v563, 0
        %569 = vmatpush.msra.mxu0 0.0
        %570 = vmatpush.msra.mxu0 0.0
        %571 = vmatpush.msra.mxu0 0.0
        %572 = vmatpush.msra.mxu0 0.0
        %573 = vmatpush.msra.mxu0 0.0
        %574 = vmatpush.msra.mxu0 0.0
        %575 = vmatpush.msra.mxu0 0.0
        %576 = vmatpush.msra.mxu0 0.0
        %577 = vmatpush.msra.mxu0 0.0
        %578 = vmatpush.msra.mxu0 0.0
        %579 = vmatpush.msra.mxu0 0.0
        %580 = vmatpush.msra.mxu0 0.0
        %581 = vmatpush.msra.mxu0 0.0
        %582 = vmatpush.msra.mxu0 0.0
        %583 = vmatpush.msra.mxu0 0.0
        %v584 = vand.u32 %v557, 4294901760
        %585 = vmatpush.msra.mxu0 %v584
        %v586 = vand.u32 %v567, 4294901760
        %v587 = vsub.f32 %v567, %v586
        %v588 = vand.u32 %v587, 4294901760
        %v589 = vsub.f32 %v587, %v588
        %v590 = vand.u32 %v589, 4294901760
        %591 = vmatmul.f32.gmra.mxu0 %v590
        %v592 = vpop.f32.mrf.mxu0
        %v593 = vadd.f32 0.0, %v592
        %594 = vdwg.mxu0
        %595 = vmatpush.msra.mxu0 0.0
        %596 = vmatpush.msra.mxu0 0.0
        %597 = vmatpush.msra.mxu0 0.0
        %598 = vmatpush.msra.mxu0 0.0
        %599 = vmatpush.msra.mxu0 0.0
        %600 = vmatpush.msra.mxu0 0.0
        %601 = vmatpush.msra.mxu0 0.0
        %602 = vmatpush.msra.mxu0 0.0
        %603 = vmatpush.msra.mxu0 0.0
        %604 = vmatpush.msra.mxu0 0.0
        %605 = vmatpush.msra.mxu0 0.0
        %606 = vmatpush.msra.mxu0 0.0
        %607 = vmatpush.msra.mxu0 0.0
        %608 = vmatpush.msra.mxu0 0.0
        %609 = vmatpush.msra.mxu0 0.0
        %v610 = vand.u32 %v557, 4294901760
        %v611 = vsub.f32 %v557, %v610
        %v612 = vand.u32 %v611, 4294901760
        %v613 = vsub.f32 %v611, %v612
        %v614 = vand.u32 %v613, 4294901760
        %615 = vmatpush.msra.mxu0 %v614
        %v616 = vand.u32 %v567, 4294901760
        %617 = vmatmul.f32.gmra.mxu0 %v616
        %v618 = vpop.f32.mrf.mxu0
        %v619 = vadd.f32 %v593, %v618
        %620 = vdwg.mxu0
        %621 = vmatpush.msra.mxu0 0.0
        %622 = vmatpush.msra.mxu0 0.0
        %623 = vmatpush.msra.mxu0 0.0
        %624 = vmatpush.msra.mxu0 0.0
        %625 = vmatpush.msra.mxu0 0.0
        %626 = vmatpush.msra.mxu0 0.0
        %627 = vmatpush.msra.mxu0 0.0
        %628 = vmatpush.msra.mxu0 0.0
        %629 = vmatpush.msra.mxu0 0.0
        %630 = vmatpush.msra.mxu0 0.0
        %631 = vmatpush.msra.mxu0 0.0
        %632 = vmatpush.msra.mxu0 0.0
        %633 = vmatpush.msra.mxu0 0.0
        %634 = vmatpush.msra.mxu0 0.0
        %635 = vmatpush.msra.mxu0 0.0
        %v636 = vand.u32 %v557, 4294901760
        %v637 = vsub.f32 %v557, %v636
        %638 = vmatpush.msra.mxu0 %v637
        %v639 = vand.u32 %v567, 4294901760
        %v640 = vsub.f32 %v567, %v639
        %641 = vmatmul.f32.gmra.mxu0 %v640
        %v642 = vpop.f32.mrf.mxu0
        %v643 = vadd.f32 %v619, %v642
        %644 = vdwg.mxu0
        %645 = vmatpush.msra.mxu0 0.0
        %646 = vmatpush.msra.mxu0 0.0
        %647 = vmatpush.msra.mxu0 0.0
        %648 = vmatpush.msra.mxu0 0.0
        %649 = vmatpush.msra.mxu0 0.0
        %650 = vmatpush.msra.mxu0 0.0
        %651 = vmatpush.msra.mxu0 0.0
        %652 = vmatpush.msra.mxu0 0.0
        %653 = vmatpush.msra.mxu0 0.0
        %654 = vmatpush.msra.mxu0 0.0
        %655 = vmatpush.msra.mxu0 0.0
        %656 = vmatpush.msra.mxu0 0.0
        %657 = vmatpush.msra.mxu0 0.0
        %658 = vmatpush.msra.mxu0 0.0
        %659 = vmatpush.msra.mxu0 0.0
        %v660 = vand.u32 %v557, 4294901760
        %661 = vmatpush.msra.mxu0 %v660
        %v662 = vand.u32 %v567, 4294901760
        %v663 = vsub.f32 %v567, %v662
        %v664 = vand.u32 %v663, 4294901760
        %665 = vmatmul.f32.gmra.mxu0 %v664
        %v666 = vpop.f32.mrf.mxu0
        %v667 = vadd.f32 %v643, %v666
        %668 = vdwg.mxu0
        %669 = vmatpush.msra.mxu0 0.0
        %670 = vmatpush.msra.mxu0 0.0
        %671 = vmatpush.msra.mxu0 0.0
        %672 = vmatpush.msra.mxu0 0.0
        %673 = vmatpush.msra.mxu0 0.0
        %674 = vmatpush.msra.mxu0 0.0
        %675 = vmatpush.msra.mxu0 0.0
        %676 = vmatpush.msra.mxu0 0.0
        %677 = vmatpush.msra.mxu0 0.0
        %678 = vmatpush.msra.mxu0 0.0
        %679 = vmatpush.msra.mxu0 0.0
        %680 = vmatpush.msra.mxu0 0.0
        %681 = vmatpush.msra.mxu0 0.0
        %682 = vmatpush.msra.mxu0 0.0
        %683 = vmatpush.msra.mxu0 0.0
        %v684 = vand.u32 %v557, 4294901760
        %v685 = vsub.f32 %v557, %v684
        %v686 = vand.u32 %v685, 4294901760
        %687 = vmatpush.msra.mxu0 %v686
        %v688 = vand.u32 %v567, 4294901760
        %689 = vmatmul.f32.gmra.mxu0 %v688
        %v690 = vpop.f32.mrf.mxu0
        %v691 = vadd.f32 %v667, %v690
        %692 = vdwg.mxu0
        %693 = vmatpush.msra.mxu0 0.0
        %694 = vmatpush.msra.mxu0 0.0
        %695 = vmatpush.msra.mxu0 0.0
        %696 = vmatpush.msra.mxu0 0.0
        %697 = vmatpush.msra.mxu0 0.0
        %698 = vmatpush.msra.mxu0 0.0
        %699 = vmatpush.msra.mxu0 0.0
        %700 = vmatpush.msra.mxu0 0.0
        %701 = vmatpush.msra.mxu0 0.0
        %702 = vmatpush.msra.mxu0 0.0
        %703 = vmatpush.msra.mxu0 0.0
        %704 = vmatpush.msra.mxu0 0.0
        %705 = vmatpush.msra.mxu0 0.0
        %706 = vmatpush.msra.mxu0 0.0
        %707 = vmatpush.msra.mxu0 0.0
        %v708 = vand.u32 %v557, 4294901760
        %709 = vmatpush.msra.mxu0 %v708
        %v710 = vand.u32 %v567, 4294901760
        %711 = vmatmul.f32.gmra.mxu0 %v710
        %v712 = vpop.f32.mrf.mxu0
        %v713 = vadd.f32 %v691, %v712
        %714 = vdwg.mxu0
        %v716 = vsel %vm565, %v564, 0
        %718 = vmatpush.msra.mxu0 0.0
        %719 = vmatpush.msra.mxu0 0.0
        %720 = vmatpush.msra.mxu0 0.0
        %721 = vmatpush.msra.mxu0 0.0
        %722 = vmatpush.msra.mxu0 0.0
        %723 = vmatpush.msra.mxu0 0.0
        %724 = vmatpush.msra.mxu0 0.0
        %725 = vmatpush.msra.mxu0 0.0
        %726 = vmatpush.msra.mxu0 0.0
        %727 = vmatpush.msra.mxu0 0.0
        %728 = vmatpush.msra.mxu0 0.0
        %729 = vmatpush.msra.mxu0 0.0
        %730 = vmatpush.msra.mxu0 0.0
        %731 = vmatpush.msra.mxu0 0.0
        %732 = vmatpush.msra.mxu0 0.0
        %v733 = vand.u32 %v561, 4294901760
        %734 = vmatpush.msra.mxu0 %v733
        %v735 = vand.u32 %v716, 4294901760
        %v736 = vsub.f32 %v716, %v735
        %v737 = vand.u32 %v736, 4294901760
        %v738 = vsub.f32 %v736, %v737
        %v739 = vand.u32 %v738, 4294901760
        %740 = vmatmul.f32.gmra.mxu0 %v739
        %v741 = vpop.f32.mrf.mxu0
        %v742 = vadd.f32 0.0, %v741
        %743 = vdwg.mxu0
        %744 = vmatpush.msra.mxu0 0.0
        %745 = vmatpush.msra.mxu0 0.0
        %746 = vmatpush.msra.mxu0 0.0
        %747 = vmatpush.msra.mxu0 0.0
        %748 = vmatpush.msra.mxu0 0.0
        %749 = vmatpush.msra.mxu0 0.0
        %750 = vmatpush.msra.mxu0 0.0
        %751 = vmatpush.msra.mxu0 0.0
        %752 = vmatpush.msra.mxu0 0.0
        %753 = vmatpush.msra.mxu0 0.0
        %754 = vmatpush.msra.mxu0 0.0
        %755 = vmatpush.msra.mxu0 0.0
        %756 = vmatpush.msra.mxu0 0.0
        %757 = vmatpush.msra.mxu0 0.0
        %758 = vmatpush.msra.mxu0 0.0
        %v759 = vand.u32 %v561, 4294901760
        %v760 = vsub.f32 %v561, %v759
        %v761 = vand.u32 %v760, 4294901760
        %v762 = vsub.f32 %v760, %v761
        %v763 = vand.u32 %v762, 4294901760
        %764 = vmatpush.msra.mxu0 %v763
        %v765 = vand.u32 %v716, 4294901760
        %766 = vmatmul.f32.gmra.mxu0 %v765
        %v767 = vpop.f32.mrf.mxu0
        %v768 = vadd.f32 %v742, %v767
        %769 = vdwg.mxu0
        %770 = vmatpush.msra.mxu0 0.0
        %771 = vmatpush.msra.mxu0 0.0
        %772 = vmatpush.msra.mxu0 0.0
        %773 = vmatpush.msra.mxu0 0.0
        %774 = vmatpush.msra.mxu0 0.0
        %775 = vmatpush.msra.mxu0 0.0
        %776 = vmatpush.msra.mxu0 0.0
        %777 = vmatpush.msra.mxu0 0.0
        %778 = vmatpush.msra.mxu0 0.0
        %779 = vmatpush.msra.mxu0 0.0
        %780 = vmatpush.msra.mxu0 0.0
        %781 = vmatpush.msra.mxu0 0.0
        %782 = vmatpush.msra.mxu0 0.0
        %783 = vmatpush.msra.mxu0 0.0
        %784 = vmatpush.msra.mxu0 0.0
        %v785 = vand.u32 %v561, 4294901760
        %v786 = vsub.f32 %v561, %v785
        %787 = vmatpush.msra.mxu0 %v786
        %v788 = vand.u32 %v716, 4294901760
        %v789 = vsub.f32 %v716, %v788
        %790 = vmatmul.f32.gmra.mxu0 %v789
        %v791 = vpop.f32.mrf.mxu0
        %v792 = vadd.f32 %v768, %v791
        %793 = vdwg.mxu0
        %794 = vmatpush.msra.mxu0 0.0
        %795 = vmatpush.msra.mxu0 0.0
        %796 = vmatpush.msra.mxu0 0.0
        %797 = vmatpush.msra.mxu0 0.0
        %798 = vmatpush.msra.mxu0 0.0
        %799 = vmatpush.msra.mxu0 0.0
        %800 = vmatpush.msra.mxu0 0.0
        %801 = vmatpush.msra.mxu0 0.0
        %802 = vmatpush.msra.mxu0 0.0
        %803 = vmatpush.msra.mxu0 0.0
        %804 = vmatpush.msra.mxu0 0.0
        %805 = vmatpush.msra.mxu0 0.0
        %806 = vmatpush.msra.mxu0 0.0
        %807 = vmatpush.msra.mxu0 0.0
        %808 = vmatpush.msra.mxu0 0.0
        %v809 = vand.u32 %v561, 4294901760
        %810 = vmatpush.msra.mxu0 %v809
        %v811 = vand.u32 %v716, 4294901760
        %v812 = vsub.f32 %v716, %v811
        %v813 = vand.u32 %v812, 4294901760
        %814 = vmatmul.f32.gmra.mxu0 %v813
        %v815 = vpop.f32.mrf.mxu0
        %v816 = vadd.f32 %v792, %v815
        %817 = vdwg.mxu0
        %818 = vmatpush.msra.mxu0 0.0
        %819 = vmatpush.msra.mxu0 0.0
        %820 = vmatpush.msra.mxu0 0.0
        %821 = vmatpush.msra.mxu0 0.0
        %822 = vmatpush.msra.mxu0 0.0
        %823 = vmatpush.msra.mxu0 0.0
        %824 = vmatpush.msra.mxu0 0.0
        %825 = vmatpush.msra.mxu0 0.0
        %826 = vmatpush.msra.mxu0 0.0
        %827 = vmatpush.msra.mxu0 0.0
        %828 = vmatpush.msra.mxu0 0.0
        %829 = vmatpush.msra.mxu0 0.0
        %830 = vmatpush.msra.mxu0 0.0
        %831 = vmatpush.msra.mxu0 0.0
        %832 = vmatpush.msra.mxu0 0.0
        %v833 = vand.u32 %v561, 4294901760
        %v834 = vsub.f32 %v561, %v833
        %v835 = vand.u32 %v834, 4294901760
        %836 = vmatpush.msra.mxu0 %v835
        %v837 = vand.u32 %v716, 4294901760
        %838 = vmatmul.f32.gmra.mxu0 %v837
        %v839 = vpop.f32.mrf.mxu0
        %v840 = vadd.f32 %v816, %v839
        %841 = vdwg.mxu0
        %842 = vmatpush.msra.mxu0 0.0
        %843 = vmatpush.msra.mxu0 0.0
        %844 = vmatpush.msra.mxu0 0.0
        %845 = vmatpush.msra.mxu0 0.0
        %846 = vmatpush.msra.mxu0 0.0
        %847 = vmatpush.msra.mxu0 0.0
        %848 = vmatpush.msra.mxu0 0.0
        %849 = vmatpush.msra.mxu0 0.0
        %850 = vmatpush.msra.mxu0 0.0
        %851 = vmatpush.msra.mxu0 0.0
        %852 = vmatpush.msra.mxu0 0.0
        %853 = vmatpush.msra.mxu0 0.0
        %854 = vmatpush.msra.mxu0 0.0
        %855 = vmatpush.msra.mxu0 0.0
        %856 = vmatpush.msra.mxu0 0.0
        %v857 = vand.u32 %v561, 4294901760
        %858 = vmatpush.msra.mxu0 %v857
        %v859 = vand.u32 %v716, 4294901760
        %860 = vmatmul.f32.gmra.mxu0 %v859
        %v861 = vpop.f32.mrf.mxu0
        %v862 = vadd.f32 %v840, %v861
        %863 = vdwg.mxu0
        %v864 = vxor.u32 %v713, 2147483648
        %v865 = vxor.u32 %v862, 2147483648
        %v866 = vmul.f32 %v864, 1.442695
        %v867 = vpow.pop %v866
        %v868 = vmul.f32 %v865, 1.442695
        %v869 = vpow.pop %v868
        %v870 = vadd.f32 %v867, 1.0
        %v871 = vadd.f32 %v869, 1.0
        %v872 = vrcp.pop %v870
        %v873 = vmul.f32 %v870, %v872
        %v874 = vsub.f32 1.0, %v873
        %v875 = vmul.f32 %v872, %v874
        %v876 = vadd.f32 %v872, %v875
        %vm877 = vweird.f32 %v870
        %vm878 = vweird.f32 %v872
        %vm879 = vmor %vm877, %vm878
        %v880 = vsel %vm879, %v872, %v876
        %v881 = vand.u32 2147483647, %v870
        %vm882 = vcmp.eq.f32.partialorder %v881, 8.507059e+37
        %v883 = vand.u32 %v870, 2147483648
        %v884 = vor.u32 1.1754944e-38, %v883
        %v885 = vsel %vm882, %v884, %v880
        %v886 = vmul.f32 1.0, %v885
        %v887 = vrcp.pop %v871
        %v888 = vmul.f32 %v871, %v887
        %v889 = vsub.f32 1.0, %v888
        %v890 = vmul.f32 %v887, %v889
        %v891 = vadd.f32 %v887, %v890
        %vm892 = vweird.f32 %v871
        %vm893 = vweird.f32 %v887
        %vm894 = vmor %vm892, %vm893
        %v895 = vsel %vm894, %v887, %v891
        %v896 = vand.u32 2147483647, %v871
        %vm897 = vcmp.eq.f32.partialorder %v896, 8.507059e+37
        %v898 = vand.u32 %v871, 2147483648
        %v899 = vor.u32 1.1754944e-38, %v898
        %v900 = vsel %vm897, %v899, %v895
        %v901 = vmul.f32 1.0, %v900
        %v902 = vld [vmem:[#allocation2] sm:$0xff]
        %v903 = vld [vmem:[#allocation2 + $0x8] sm:$0xff]
        %905 = vset.pattern.permute.xlu0 32
        %906 = vperm.xlu0 %905, %v886
        %v907 = vpop.permute.xlu0 %906
        %910 = vset.pattern.permute.xlu0 32
        %911 = vperm.xlu0 %910, %v901
        %v912 = vpop.permute.xlu0 %911
        %v914 = vmul.f32 %v713, %v907
        %v915 = vmul.f32 %v862, %v912
        %v916 = vadd.f32 %v902, %v914
        %v917 = vadd.f32 %v903, %v915
        %918 = vst.msk [vmem:[#allocation2] sm:$0xff] %vm340, %v916
        %919 = vst.msk [vmem:[#allocation2 + $0x8] sm:$0xff] %vm340, %v917
        %p920 = scmp.eq.s32.totalorder %s24, 11
        // Predicated region
        $region83: #{tpu_custom_call.1} parent=69 // pred_check
          %p921 = pneg %p920
        $region84: #{tpu_custom_call.1} parent=69 // pred_check_branch
          %923 = sbr.rel (%p921) target = $region86
        $region85: #{tpu_custom_call.1} parent=69 // pred_region
          %v924 = vld [vmem:[#allocation2] sm:$0xff]
          %v925 = vld [vmem:[#allocation2 + $0x8] sm:$0xff]
          %v926 = vadd.f32 %v924, %v330
          %v927 = vadd.f32 %v925, %v331
          %v928 = vmax.f32 %v926, 0.0
          %v929 = vmax.f32 %v927, 0.0
          %v930 = vrot.slane %v928, 4
          %vm931 = vcmask 1047556
          %v932 = vsel %vm931, 0.0, %v930
          %v934 = vunpack.c.l.s4 1983009808
          %v935 = vunpack.c.0.s8 %v934
          %v936 = vperm.slane %v928, %v935
          %v938 = vunpack.c.l.s4 1983009808
          %v939 = vunpack.c.0.s8 %v938
          %v940 = vperm.slane %v932, %v939
          %v941 = vrot.slane %v929, 4
          %v942 = vsel %vm931, 0.0, %v941
          %v944 = vunpack.c.l.s4 1983009808
          %v945 = vunpack.c.0.s8 %v944
          %v946 = vperm.slane %v929, %v945
          %v948 = vunpack.c.l.s4 1983009808
          %v949 = vunpack.c.0.s8 %v948
          %v950 = vperm.slane %v942, %v949
          %v951 = vrot.slane %v946, 4
          %v952 = vsel %vm931, %v951, %v936
          %v953 = vrot.slane %v936, 4
          %v954 = vsel %vm931, %v946, %v953
          %v956 = vunpack.c.l.s4 1934713408
          %v957 = vunpack.c.0.s8 %v956
          %v958 = vperm.slane %v952, %v957
          %v960 = vunpack.c.l.s4 1934713408
          %v961 = vunpack.c.0.s8 %v960
          %v962 = vperm.slane %v954, %v961
          %v963 = vrot.slane %v950, 4
          %v964 = vsel %vm931, %v963, %v940
          %v965 = vrot.slane %v940, 4
          %v966 = vsel %vm931, %v950, %v965
          %v968 = vunpack.c.l.s4 1934713408
          %v969 = vunpack.c.0.s8 %v968
          %v970 = vperm.slane %v964, %v969
          %v972 = vunpack.c.l.s4 1934713408
          %v973 = vunpack.c.0.s8 %v972
          %v974 = vperm.slane %v966, %v973
          %v975 = vrot.slane %v958, 4
          %v976 = vsel %vm931, 0.0, %v975
          %v977 = vrot.slane %v962, 4
          %v978 = vsel %vm931, 0.0, %v977
          %v979 = vrot.slane %v970, 4
          %v980 = vsel %vm931, 0.0, %v979
          %v981 = vrot.slane %v974, 4
          %v982 = vsel %vm931, 0.0, %v981
          %984 = vrot.lane.b32.xlu0 %v976, 32
          %v985 = vpop.permute.xlu0 %984
          %988 = vrot.lane.b32.xlu0 %v962, 64
          %v989 = vpop.permute.xlu0 %988
          %992 = vrot.lane.b32.xlu0 %v978, 96
          %v993 = vpop.permute.xlu0 %992
          %996 = vrot.lane.b32.xlu0 %v980, 32
          %v997 = vpop.permute.xlu0 %996
          %1000 = vrot.lane.b32.xlu0 %v974, 64
          %v1001 = vpop.permute.xlu0 %1000
          %1004 = vrot.lane.b32.xlu0 %v982, 96
          %v1005 = vpop.permute.xlu0 %1004
          %v1007 = vsel %vm340, %v958, %v985
          %vm1008 = vcmask 523264
          %v1009 = vsel %vm1008, %v1007, %v989
          %vm1010 = vcmask 785408
          %v1011 = vsel %vm1010, %v1009, %v993
          %v1012 = vsel %vm340, %v970, %v997
          %v1013 = vsel %vm1008, %v1012, %v1001
          %v1014 = vsel %vm1010, %v1013, %v1005
          %v1017 = vrot.slane %v1014, 6
          %vm1018 = vcmask 1041408
          %v1019 = vsel %vm1018, %v1011, %v1017
          %1021 = vst [vmem:[#allocation7] sm:$0xf] %v1019
        $region86: #{tpu_custom_call.1} parent=69 // pred_fallthru
          _
        // Predicated region
        $region87: #{tpu_custom_call.1} parent=69 // pred_check
          %p1022 = pneg %p155
        $region88: #{tpu_custom_call.1} parent=69 // pred_check_branch
          %1024 = sbr.rel (%p1022) target = $region90
        $region89: #{tpu_custom_call.1} parent=69 // pred_region
          %1026 = vsyncadd [#allocation6], 0
          %s1027 = smul.addr %s23, 2
          %s1028 = smul.addr %s1027, 2
          %s1029 = scalar_lea.hbm %s4, %s1028
          %s1031 = sshll.u32 [#allocation7], 4
          %s1032 = int_to_ptr.vmem [resolvable:$true] %s1031
          %s1033 = sshll.u32 %s1029, 4
          %s1034 = int_to_ptr.hbm [resolvable:$true] %s1033
          %1036 = dma.vmem_to_hbm [thread:$0]  %s1032, 64, %s1034, [#allocation6]
        $region90: #{tpu_custom_call.1} parent=69 // pred_fallthru
          _
        // Predicated region
        $region91: #{tpu_custom_call.1} parent=69 // pred_check
          %p1037 = pneg %p155
        $region92: #{tpu_custom_call.1} parent=69 // pred_check_branch
          %1039 = sbr.rel (%p1037) target = $region94
        $region93: #{tpu_custom_call.1} parent=69 // pred_region
          %1041 = dma.done [#allocation6], 64
        $region94: #{tpu_custom_call.1} parent=69 // pred_fallthru
          _
      $region70: #{tpu_custom_call.1} parent=5 // pred_fallthru
        _
      %p1042 = scmp.le.s32.totalorder 2, %s14
      // Predicated region
      $region95: #{tpu_custom_call.1} parent=5 // pred_check
        %p1043 = pneg %p1042
      $region96: #{tpu_custom_call.1} parent=5 // pred_check_branch
        %1045 = sbr.rel (%p1043) target = $region98
      $region97: #{tpu_custom_call.1} parent=5 // pred_region
        %s1046 = ssub.s32 %s14, 2
      $region98: #{tpu_custom_call.1} parent=5 // pred_fallthru
        _
    $region6: #{tpu_custom_call.1} parent=1 // loop_footer
      %s18 = sadd.s32 1, %s14
    $region7: #{tpu_custom_call.1} parent=1 // loop_footer_branch
      %13 = sbr.rel target = $region3
    $region8: #{tpu_custom_call.1} parent=1 // loop_exit
      _
    %1047 = vsyncpa [#allocation5], 1
    %s1048 = scalar_lea.sflag [#allocation5], 1
    %1049 = vsyncpa %s1048, 1
    %1050 = vsyncpa [#allocation6], 1
    %s1051 = scalar_lea.sflag [#allocation6], 1
    %1052 = vsyncpa %s1051, 1

</llo_original>
